<compile_context>
chip_gen: v7x
topology: tpu7x:2x2x1
jax: 0.10.0
libtpu: 0.0.40
codegen_flags: <defaults>
</compile_context>

<pallas_src>
import functools

import jax
import jax.numpy as jnp
from jax.experimental import pallas as pl
from jax.experimental.pallas import tpu as pltpu


def _round_up(x: int, m: int) -> int:
    return (x + m - 1) // m * m


def two_layer_kernel(x_ref, w1_ref, b1_ref, w2_ref, b2_ref, y_ref):
    """One batch tile: y = relu(x @ W1 + b1) @ W2 + b2, f32 accumulation."""
    # Cast x to the weight dtype in VMEM so bf16 weights use the bf16 MXU fast
    # path on all generations (f32 x would otherwise promote the whole dot).
    x = x_ref[...].astype(w1_ref.dtype)
    h = jnp.dot(x, w1_ref[...], preferred_element_type=jnp.float32)
    # Bias + ReLU epilogue in f32 on the VPU (v5e-safe; matches PyTorch).
    h = jnp.maximum(h + b1_ref[...], 0.0)
    # Second MXU dot, operands in the weight dtype, f32 accumulation.
    h = h.astype(w2_ref.dtype)
    y = jnp.dot(h, w2_ref[...], preferred_element_type=jnp.float32)
    y_ref[...] = (y + b2_ref[...]).astype(y_ref.dtype)


def prepare_params(w1, b1, w2, b2, *, compute_dtype=jnp.float32):
    """One-time parameter repack (done once per model, NOT per forward call).

    - Transposes to (D_in, H) / (H, D_out) so both matmuls are plain row-major
      MXU dots inside the kernel (no per-call w.T and its extra HBM passes).
    - Zero-pads H and D_out up to multiples of 128 so the hidden tile and the
      output store are lane-dense. Padded hidden units have zero weight and
      zero bias -> relu(0)=0 -> contribute nothing; padded output columns are
      zero and sliced off by the wrapper, so semantics are unchanged.
    - compute_dtype=jnp.bfloat16 is beneficial on ALL generations (v5e/v6e/
      v7x): the MXU takes bf16 operands at full rate everywhere (the "no bf16
      on v5e" caveat applies only to VPU elementwise ops, which stay f32
      here), and bf16 weights halve weight HBM/VMEM traffic. Biases and the
      accumulation/epilogue remain f32.
    """
    H, D_in = w1.shape
    D_out = w2.shape[0]
    H_p = _round_up(H, 128)
    D_out_p = _round_up(D_out, 128)

    w1_t = jnp.zeros((D_in, H_p), compute_dtype).at[:, :H].set(
        w1.T.astype(compute_dtype))
    b1_p = jnp.zeros((1, H_p), jnp.float32).at[:, :H].set(b1.astype(jnp.float32))
    w2_t = jnp.zeros((H_p, D_out_p), compute_dtype).at[:H, :D_out].set(
        w2.T.astype(compute_dtype))
    b2_p = jnp.zeros((1, D_out_p), jnp.float32).at[:, :D_out].set(
        b2.astype(jnp.float32))
    return w1_t, b1_p, w2_t, b2_p, int(D_out)


@functools.partial(jax.jit, static_argnames=("d_out", "block_n"))
def two_layer_net(x, w1_t, b1_p, w2_t, b2_p, *, d_out, block_n=512):
    """x: (N, D_in) f32; repacked params from prepare_params(); returns (N, d_out)."""
    N, D_in = x.shape
    H_p = w1_t.shape[1]
    D_out_p = w2_t.shape[1]

    # Batch tile: at most block_n rows, multiple of 8 sublanes (x stays f32 in
    # HBM; the bf16 cast happens in-kernel, so no 16-row packing constraint),
    # and capped at ~ceil(N/2) so the parallel grid axis has >= 2 steps and
    # both v7x TensorCores get work.
    tn = min(block_n, _round_up(N, 8))
    if N > 8:
        tn = min(tn, _round_up(pl.cdiv(N, 2), 8))
    grid = (pl.cdiv(N, tn),)  # ragged last block: OOB output rows discarded

    # VMEM budget: double-buffered resident params + double-buffered streaming
    # x / y tiles + f32 hidden & output intermediates.
    x_item = jnp.dtype(x.dtype).itemsize
    w_item = jnp.dtype(w1_t.dtype).itemsize
    w_bytes = 2 * ((w1_t.size + w2_t.size) * w_item
                   + 4 * (b1_p.size + b2_p.size))
    stream_bytes = 2 * tn * (D_in * x_item + D_out_p * x_item)
    interm_bytes = tn * (H_p + D_out_p) * 4
    need = w_bytes + stream_bytes + interm_bytes

    # Generation-aware cap: 7/8 of physical VMEM leaves headroom for Mosaic
    # internal scratch (≈56 MiB on v7x; ≈112 MiB on v5e/v6e).
    try:
        phys = int(pltpu.get_tpu_info().vmem_capacity_bytes)
    except Exception:
        phys = 64 * 1024 * 1024  # conservative (v7x per-TC) fallback
    cap = (phys * 7) // 8
    vmem_limit = int(min(max(2 * need, 32 * 1024 * 1024), cap))

    y_pad = pl.pallas_call(
        two_layer_kernel,
        out_shape=jax.ShapeDtypeStruct((N, D_out_p), x.dtype),
        grid_spec=pltpu.PrefetchScalarGridSpec(
            num_scalar_prefetch=0,
            grid=grid,
            in_specs=[
                pl.BlockSpec((tn, D_in), lambda i: (i, 0)),      # x: streamed
                pl.BlockSpec((D_in, H_p), lambda i: (0, 0)),     # W1: VMEM-resident
                pl.BlockSpec((1, H_p), lambda i: (0, 0)),        # b1: VMEM-resident
                pl.BlockSpec((H_p, D_out_p), lambda i: (0, 0)),  # W2: VMEM-resident
                pl.BlockSpec((1, D_out_p), lambda i: (0, 0)),    # b2: VMEM-resident
            ],
            out_specs=pl.BlockSpec((tn, D_out_p), lambda i: (i, 0)),  # lane-dense store
        ),
        compiler_params=pltpu.CompilerParams(
            dimension_semantics=("parallel",),  # independent batch tiles (v7x 2xTC)
            vmem_limit_bytes=vmem_limit,
        ),
    )(x, w1_t, b1_p, w2_t, b2_p)

    # Strip D_out padding (cheap XLA slice outside the kernel).
    return y_pad[:, :d_out]


if __name__ == "__main__":
    # Small shapes consistent with TwoLayerNet: (N, D_in) -> H -> D_out.
    N, D_in, H, D_out = 64, 100, 32, 10

    key = jax.random.PRNGKey(0)
    kx, kw1, kb1, kw2, kb2 = jax.random.split(key, 5)

    lim1 = 1.0 / float(D_in) ** 0.5
    lim2 = 1.0 / float(H) ** 0.5
    x = jax.random.normal(kx, (N, D_in), dtype=jnp.float32)
    w1 = jax.random.uniform(kw1, (H, D_in), jnp.float32, minval=-lim1, maxval=lim1)
    b1 = jax.random.uniform(kb1, (H,), jnp.float32, minval=-lim1, maxval=lim1)
    w2 = jax.random.uniform(kw2, (D_out, H), jnp.float32, minval=-lim2, maxval=lim2)
    b2 = jax.random.uniform(kb2, (D_out,), jnp.float32, minval=-lim2, maxval=lim2)

    # Pure-JAX reference of the exact PyTorch semantics.
    y_ref = jnp.maximum(x @ w1.T + b1, 0.0) @ w2.T + b2

    # f32 path (exact PyTorch numerics).
    w1_t, b1_p, w2_t, b2_p, d_out = prepare_params(
        w1, b1, w2, b2, compute_dtype=jnp.float32)
    y = two_layer_net(x, w1_t, b1_p, w2_t, b2_p, d_out=d_out)
    jax.block_until_ready(y)
    assert y.shape == (N, D_out)
    assert jnp.allclose(y, y_ref, atol=1e-3, rtol=1e-3), float(
        jnp.max(jnp.abs(y - y_ref)))

    # bf16 MXU fast path (weights + in-kernel x cast; f32 epilogue/accum).
    w1_b, b1_b, w2_b, b2_b, d_out_b = prepare_params(
        w1, b1, w2, b2, compute_dtype=jnp.bfloat16)
    y_bf = two_layer_net(x, w1_b, b1_b, w2_b, b2_b, d_out=d_out_b)
    jax.block_until_ready(y_bf)
    assert y_bf.shape == (N, D_out)
    assert jnp.allclose(y_bf, y_ref, atol=5e-2, rtol=5e-2), float(
        jnp.max(jnp.abs(y_bf - y_ref)))

    print("KERNEL_OK")
</pallas_src>

<mosaic_0001>
module attributes {stable_mosaic.version = 11 : i64} {
  func.func @two_layer_kernel(%arg0: i32, %arg1: memref<32x100xf32, #tpu.memory_space<vmem>>, %arg2: memref<100x128xf32, #tpu.memory_space<vmem>>, %arg3: memref<1x128xf32, #tpu.memory_space<vmem>>, %arg4: memref<128x128xf32, #tpu.memory_space<vmem>>, %arg5: memref<1x128xf32, #tpu.memory_space<vmem>>, %arg6: memref<32x128xf32, #tpu.memory_space<vmem>>) attributes {dimension_semantics = [#tpu.dimension_semantics<parallel>], iteration_bounds = array<i64: 2>, scalar_prefetch = 0 : i64, scratch_operands = 0 : i64, tpu.core_type = #tpu.core_type<tc>, window_params = [{transform_indices = @transform_0, window_bounds = array<i64: 32, 100>}, {pipeline_mode = #tpu.pipeline_mode<synchronous>, transform_indices = @transform_1, window_bounds = array<i64: 100, 128>}, {pipeline_mode = #tpu.pipeline_mode<synchronous>, transform_indices = @transform_2, window_bounds = array<i64: 1, 128>}, {pipeline_mode = #tpu.pipeline_mode<synchronous>, transform_indices = @transform_3, window_bounds = array<i64: 128, 128>}, {pipeline_mode = #tpu.pipeline_mode<synchronous>, transform_indices = @transform_4, window_bounds = array<i64: 1, 128>}, {transform_indices = @transform_5, window_bounds = array<i64: 32, 128>}]} {
    %c0 = arith.constant 0 : index
    %c0_0 = arith.constant 0 : index
    %0 = vector.load %arg1[%c0, %c0_0] : memref<32x100xf32, #tpu.memory_space<vmem>>, vector<32x100xf32>
    %c0_1 = arith.constant 0 : index
    %c0_2 = arith.constant 0 : index
    %1 = vector.load %arg2[%c0_1, %c0_2] : memref<100x128xf32, #tpu.memory_space<vmem>>, vector<100x128xf32>
    %cst = arith.constant dense<0.000000e+00> : vector<32x128xf32>
    %2 = tpu.matmul %0, %1, %cst {dimension_numbers = #tpu.dot_dimension_numbers<[1], [0], [0], [1], [0, 0, 1, 1], [], []>} : vector<32x100xf32>, vector<100x128xf32>, vector<32x128xf32> -> vector<32x128xf32>
    %c0_3 = arith.constant 0 : index
    %c0_4 = arith.constant 0 : index
    %3 = vector.load %arg3[%c0_3, %c0_4] : memref<1x128xf32, #tpu.memory_space<vmem>>, vector<1x128xf32>
    %4 = vector.broadcast %3 : vector<1x128xf32> to vector<32x128xf32>
    %5 = arith.addf %2, %4 : vector<32x128xf32>
    %cst_5 = arith.constant 0.000000e+00 : f32
    %6 = vector.broadcast %cst_5 : f32 to vector<32x128xf32>
    %7 = arith.maximumf %5, %6 : vector<32x128xf32>
    %c0_6 = arith.constant 0 : index
    %c0_7 = arith.constant 0 : index
    %8 = vector.load %arg4[%c0_6, %c0_7] : memref<128x128xf32, #tpu.memory_space<vmem>>, vector<128x128xf32>
    %cst_8 = arith.constant dense<0.000000e+00> : vector<32x128xf32>
    %9 = tpu.matmul %7, %8, %cst_8 {dimension_numbers = #tpu.dot_dimension_numbers<[1], [0], [0], [1], [0, 0, 1, 1], [], []>} : vector<32x128xf32>, vector<128x128xf32>, vector<32x128xf32> -> vector<32x128xf32>
    %c0_9 = arith.constant 0 : index
    %c0_10 = arith.constant 0 : index
    %10 = vector.load %arg5[%c0_9, %c0_10] : memref<1x128xf32, #tpu.memory_space<vmem>>, vector<1x128xf32>
    %11 = vector.broadcast %10 : vector<1x128xf32> to vector<32x128xf32>
    %12 = arith.addf %9, %11 : vector<32x128xf32>
    %c0_11 = arith.constant 0 : index
    %c0_12 = arith.constant 0 : index
    %13 = vector.load %arg6[%c0_11, %c0_12] : memref<32x128xf32, #tpu.memory_space<vmem>>, vector<32x128xf32>
    tpu.vector_store %arg6[%c0_11, %c0_12], %12 {strides = array<i32>} : memref<32x128xf32, #tpu.memory_space<vmem>>, vector<32x128xf32>,
    return
  }
  func.func @transform_0(%arg0: i32) -> (i32, i32) {
    %c0_i32 = arith.constant 0 : i32
    %c0_i32_0 = arith.constant 0 : i32
    return %arg0, %c0_i32 : i32, i32
  }
  func.func @transform_1(%arg0: i32) -> (i32, i32) {
    %c0_i32 = arith.constant 0 : i32
    %c0_i32_0 = arith.constant 0 : i32
    %c0_i32_1 = arith.constant 0 : i32
    return %c0_i32, %c0_i32_0 : i32, i32
  }
  func.func @transform_2(%arg0: i32) -> (i32, i32) {
    %c0_i32 = arith.constant 0 : i32
    %c0_i32_0 = arith.constant 0 : i32
    %c0_i32_1 = arith.constant 0 : i32
    return %c0_i32, %c0_i32_0 : i32, i32
  }
  func.func @transform_3(%arg0: i32) -> (i32, i32) {
    %c0_i32 = arith.constant 0 : i32
    %c0_i32_0 = arith.constant 0 : i32
    %c0_i32_1 = arith.constant 0 : i32
    return %c0_i32, %c0_i32_0 : i32, i32
  }
  func.func @transform_4(%arg0: i32) -> (i32, i32) {
    %c0_i32 = arith.constant 0 : i32
    %c0_i32_0 = arith.constant 0 : i32
    %c0_i32_1 = arith.constant 0 : i32
    return %c0_i32, %c0_i32_0 : i32, i32
  }
  func.func @transform_5(%arg0: i32) -> (i32, i32) {
    %c0_i32 = arith.constant 0 : i32
    %c0_i32_0 = arith.constant 0 : i32
    return %arg0, %c0_i32 : i32, i32
  }
}

</mosaic_0001>

<llo_original>
// kernel: two_layer_net.1
$region0: #{two_layer_net.1}
  #allocation0 [shape = 'u32[]', space=smem, size = 0x4, offset = 0x4, fixed_abs, tag = 'smem constant byte address 0x4 - core index']
  #allocation1 [shape = 'u32[144,128]{1,0:T(1,128)}', space=vmem, size = 0x12000, scoped, tag = 'internal scratch']
  %s0 = inlined_call_operand.hbm [shape: f32[64,100], index: 0, kind: input, shape index: {}]
  %s1 = inlined_call_operand.hbm [shape: f32[100,128], index: 1, kind: input, shape index: {}]
  %s2 = inlined_call_operand.vmem [shape: f32[1,128], index: 2, kind: input, shape index: {}]
  %s3 = inlined_call_operand.hbm [shape: f32[128,128], index: 3, kind: input, shape index: {}]
  %s4 = inlined_call_operand.vmem [shape: f32[1,128], index: 4, kind: input, shape index: {}]
  %s5 = inlined_call_operand.vmem [shape: f32[64,128], index: 5, kind: output, shape index: {}]
  %s6 = sld [smem:[#allocation0]]
  $region65: #{two_layer_net.1} parent=0
    _
  %s8 = ssub.s32 1, %s6
  %s9 = scalar_select 0, %s8, %s6
  $region1: #{two_layer_net.1} parent=0
    #allocation2 [shape = 'u8[32768]{0}', space=vmem, size = 0x8000, scoped, tag = 'input window, operand 0']
    #allocation3 [shape = 's32[2]{0}', space=sflag, size = 0x8, scoped, tag = 'scoped memory for two_layer_net.1']
    #allocation4 [shape = 'u8[53248]{0}', space=vmem, size = 0xd000, scoped, tag = 'input window, operand 1, single buffered']
    #allocation5 [shape = 's32[1]{0}', space=sflag, size = 0x4, scoped, tag = 'scoped memory for two_layer_net.1']
    #allocation6 [shape = 'u8[65536]{0}', space=vmem, size = 0x10000, scoped, tag = 'input window, operand 3, single buffered']
    %10 = vsyncpa [#allocation3], 0
    %s11 = scalar_lea.sflag [#allocation3], 1
    %12 = vsyncpa %s11, 0
    %13 = vsyncpa [#allocation5], 0
    loop: start=0, step=1, limit=4
    $region2: #{two_layer_net.1} parent=1 // loop_pre_header
      _
    $region3: #{two_layer_net.1} parent=1 // loop_header
      %s15 = sphi 0, %s19
      %p16 = scmp.ge.s32.totalorder %s15, 4
      %s25 = sphi 0, %s27
      %s28 = sphi 0, %s25
      %s29 = sphi 0, %s28
      %s45 = sphi 0, %s29
      %s49 = sphi 0, %s49
      %s51 = sphi 0, %s49
      %s52 = sphi 0, %s51
      %s66 = sphi 0, %s52
      %s70 = sphi 0, %s70
      %s72 = sphi 0, %s70
      %s73 = sphi 0, %s72
      %s87 = sphi 0, %s73
      %s91 = sphi 0, %s91
      %s93 = sphi 0, %s91
      %s94 = sphi 0, %s93
      %s108 = sphi 0, %s94
      %s112 = sphi 0, %s112
      %s114 = sphi 0, %s112
      %s115 = sphi 0, %s114
      %s129 = sphi 0, %s115
      %s135 = sphi 0, %s137
      %s138 = sphi 0, %s135
      %s139 = sphi 0, %s138
      %s155 = sphi 0, %s139
    $region4: #{two_layer_net.1} parent=1 // loop_header_branch
      %18 = sbr.rel (%p16) target = $region8
    $region5: #{two_layer_net.1} parent=1 // loop_body
      %s20 = ssub.s32 %s15, 1
      %s21 = ssub.s32 %s15, 2
      %s22 = sadd.s32 %s15, 1
      %s23 = ssub.s32 %s15, %s22
      %p24 = scmp.eq.s32.totalorder %s23, 0
      %s26 = sadd.s32 %s25, 1
      %s27 = scalar_select %p24, %s25, %s26
      %p30 = pneg %p24
      %p31 = scmp.eq.s32.totalorder %s15, 1
      %p32 = por %p30, %p31
      %p33 = scmp.ne.s32.totalorder %s25, %s28
      %p34 = scmp.eq.s32.totalorder %s15, 0
      %p35 = por %p33, %p34
      %p36 = scmp.ne.s32.totalorder %s25, %s28
      %p37 = scmp.eq.s32.totalorder %s20, 1
      %p38 = por %p36, %p37
      %p39 = scmp.ne.s32.totalorder %s28, %s29
      %p40 = scmp.eq.s32.totalorder %s20, 0
      %p41 = por %p39, %p40
      %p42 = scmp.ne.s32.totalorder %s28, %s29
      %p43 = scmp.eq.s32.totalorder %s21, 1
      %p44 = por %p42, %p43
      %p46 = scmp.ne.s32.totalorder %s29, %s45
      %p47 = scmp.eq.s32.totalorder %s21, 0
      %p48 = por %p46, %p47
      %s50 = sadd.s32 %s49, 1
      %p53 = scmp.eq.s32.totalorder %s15, 1
      %p54 = scmp.ne.s32.totalorder %s49, %s51
      %p55 = scmp.eq.s32.totalorder %s15, 0
      %p56 = por %p54, %p55
      %p57 = scmp.ne.s32.totalorder %s49, %s51
      %p58 = scmp.eq.s32.totalorder %s20, 1
      %p59 = por %p57, %p58
      %p60 = scmp.ne.s32.totalorder %s51, %s52
      %p61 = scmp.eq.s32.totalorder %s20, 0
      %p62 = por %p60, %p61
      %p63 = scmp.ne.s32.totalorder %s51, %s52
      %p64 = scmp.eq.s32.totalorder %s21, 1
      %p65 = por %p63, %p64
      %p67 = scmp.ne.s32.totalorder %s52, %s66
      %p68 = scmp.eq.s32.totalorder %s21, 0
      %p69 = por %p67, %p68
      %s71 = sadd.s32 %s70, 1
      %p74 = scmp.eq.s32.totalorder %s15, 1
      %p75 = scmp.ne.s32.totalorder %s70, %s72
      %p76 = scmp.eq.s32.totalorder %s15, 0
      %p77 = por %p75, %p76
      %p78 = scmp.ne.s32.totalorder %s70, %s72
      %p79 = scmp.eq.s32.totalorder %s20, 1
      %p80 = por %p78, %p79
      %p81 = scmp.ne.s32.totalorder %s72, %s73
      %p82 = scmp.eq.s32.totalorder %s20, 0
      %p83 = por %p81, %p82
      %p84 = scmp.ne.s32.totalorder %s72, %s73
      %p85 = scmp.eq.s32.totalorder %s21, 1
      %p86 = por %p84, %p85
      %p88 = scmp.ne.s32.totalorder %s73, %s87
      %p89 = scmp.eq.s32.totalorder %s21, 0
      %p90 = por %p88, %p89
      %s92 = sadd.s32 %s91, 1
      %p95 = scmp.eq.s32.totalorder %s15, 1
      %p96 = scmp.ne.s32.totalorder %s91, %s93
      %p97 = scmp.eq.s32.totalorder %s15, 0
      %p98 = por %p96, %p97
      %p99 = scmp.ne.s32.totalorder %s91, %s93
      %p100 = scmp.eq.s32.totalorder %s20, 1
      %p101 = por %p99, %p100
      %p102 = scmp.ne.s32.totalorder %s93, %s94
      %p103 = scmp.eq.s32.totalorder %s20, 0
      %p104 = por %p102, %p103
      %p105 = scmp.ne.s32.totalorder %s93, %s94
      %p106 = scmp.eq.s32.totalorder %s21, 1
      %p107 = por %p105, %p106
      %p109 = scmp.ne.s32.totalorder %s94, %s108
      %p110 = scmp.eq.s32.totalorder %s21, 0
      %p111 = por %p109, %p110
      %s113 = sadd.s32 %s112, 1
      %p116 = scmp.eq.s32.totalorder %s15, 1
      %p117 = scmp.ne.s32.totalorder %s112, %s114
      %p118 = scmp.eq.s32.totalorder %s15, 0
      %p119 = por %p117, %p118
      %p120 = scmp.ne.s32.totalorder %s112, %s114
      %p121 = scmp.eq.s32.totalorder %s20, 1
      %p122 = por %p120, %p121
      %p123 = scmp.ne.s32.totalorder %s114, %s115
      %p124 = scmp.eq.s32.totalorder %s20, 0
      %p125 = por %p123, %p124
      %p126 = scmp.ne.s32.totalorder %s114, %s115
      %p127 = scmp.eq.s32.totalorder %s21, 1
      %p128 = por %p126, %p127
      %p130 = scmp.ne.s32.totalorder %s115, %s129
      %p131 = scmp.eq.s32.totalorder %s21, 0
      %p132 = por %p130, %p131
      %s133 = ssub.s32 %s15, %s22
      %p134 = scmp.eq.s32.totalorder %s133, 0
      %s136 = sadd.s32 %s135, 1
      %s137 = scalar_select %p134, %s135, %s136
      %p140 = pneg %p134
      %p141 = scmp.eq.s32.totalorder %s15, 1
      %p142 = por %p140, %p141
      %p143 = scmp.ne.s32.totalorder %s135, %s138
      %p144 = scmp.eq.s32.totalorder %s15, 0
      %p145 = por %p143, %p144
      %p146 = scmp.ne.s32.totalorder %s135, %s138
      %p147 = scmp.eq.s32.totalorder %s20, 1
      %p148 = por %p146, %p147
      %p149 = scmp.ne.s32.totalorder %s138, %s139
      %p150 = scmp.eq.s32.totalorder %s20, 0
      %p151 = por %p149, %p150
      %p152 = scmp.ne.s32.totalorder %s138, %s139
      %p153 = scmp.eq.s32.totalorder %s21, 1
      %p154 = por %p152, %p153
      %p156 = scmp.ne.s32.totalorder %s139, %s155
      %p157 = scmp.eq.s32.totalorder %s21, 0
      %p158 = por %p156, %p157
      %p159 = scmp.le.s32.totalorder 1, %s15
      %p160 = scmp.lt.s32.totalorder %s15, 3
      %p161 = pnand %p159, %p160
      %p162 = pneg %p161
      // Predicated region
      $region9: #{two_layer_net.1} parent=5 // pred_check
        _
      $region10: #{two_layer_net.1} parent=5 // pred_check_branch
        %164 = sbr.rel (%p161) target = $region12
      $region11: #{two_layer_net.1} parent=5 // pred_region
        %s165 = ssub.s32 %s15, 1
        // Predicated region
        $region13: #{two_layer_net.1} parent=11 // pred_check
          %p166 = pneg %p62
        $region14: #{two_layer_net.1} parent=11 // pred_check_branch
          %168 = sbr.rel (%p166) target = $region16
        $region15: #{two_layer_net.1} parent=11 // pred_region
          %s170 = ssub.s32 1664, 1664
          %171 = vsyncadd [#allocation5], %s170
          %s172 = sshll.u32 [#allocation4], 4
          %s173 = int_to_ptr.vmem [resolvable:$true] %s172
          %178 = dma.hbm_to_vmem [thread:$0]  %s1, 1664, %s173, [#allocation5], 128, 128, 8
        $region16: #{two_layer_net.1} parent=11 // pred_fallthru
          _
        // Predicated region
        $region17: #{two_layer_net.1} parent=11 // pred_check
          %p179 = pneg %p83
        $region18: #{two_layer_net.1} parent=11 // pred_check_branch
          %181 = sbr.rel (%p179) target = $region20
        $region19: #{two_layer_net.1} parent=11 // pred_region
          _
        $region20: #{two_layer_net.1} parent=11 // pred_fallthru
          _
        // Predicated region
        $region21: #{two_layer_net.1} parent=11 // pred_check
          %p182 = pneg %p104
        $region22: #{two_layer_net.1} parent=11 // pred_check_branch
          %184 = sbr.rel (%p182) target = $region24
        $region23: #{two_layer_net.1} parent=11 // pred_region
          %s186 = ssub.s32 2048, 2048
          %187 = vsyncadd [#allocation5], %s186
          %s188 = sshll.u32 [#allocation6], 4
          %s189 = int_to_ptr.vmem [resolvable:$true] %s188
          %194 = dma.hbm_to_vmem [thread:$0]  %s3, 2048, %s189, [#allocation5], 128, 128, 8
        $region24: #{two_layer_net.1} parent=11 // pred_fallthru
          _
        // Predicated region
        $region25: #{two_layer_net.1} parent=11 // pred_check
          %p195 = pneg %p125
        $region26: #{two_layer_net.1} parent=11 // pred_check_branch
          %197 = sbr.rel (%p195) target = $region28
        $region27: #{two_layer_net.1} parent=11 // pred_region
          _
        $region28: #{two_layer_net.1} parent=11 // pred_fallthru
          _
      $region12: #{two_layer_net.1} parent=5 // pred_fallthru
        _
      %p198 = scmp.lt.s32.totalorder %s15, 2
      // Predicated region
      $region29: #{two_layer_net.1} parent=5 // pred_check
        %p199 = pneg %p198
      $region30: #{two_layer_net.1} parent=5 // pred_check_branch
        %201 = sbr.rel (%p199) target = $region32
      $region31: #{two_layer_net.1} parent=5 // pred_region
        // Predicated region
        $region33: #{two_layer_net.1} parent=31 // pred_check
          %p202 = pneg %p35
        $region34: #{two_layer_net.1} parent=31 // pred_check_branch
          %204 = sbr.rel (%p202) target = $region36
        $region35: #{two_layer_net.1} parent=31 // pred_region
          %s205 = sand.u32 %s25, 1
          %s206 = scalar_lea.sflag [#allocation3], %s205
          %s207 = sand.u32 %s25, 1
          %s208 = smul.addr %s207, 32
          %s209 = scalar_lea.vmem [#allocation2], %s208
          %s210 = smul.u32 4, %s15
          %s212 = ssub.s32 512, 512
          %213 = vsyncadd %s206, %s212
          %s214 = smul.addr %s210, 128
          %s215 = scalar_lea.hbm %s0, %s214
          %s216 = sshll.u32 %s209, 4
          %s217 = int_to_ptr.vmem [resolvable:$true] %s216
          %222 = dma.hbm_to_vmem [thread:$0]  %s215, 512, %s217, %s206, 128, 128, 8
        $region36: #{two_layer_net.1} parent=31 // pred_fallthru
          _
      $region32: #{two_layer_net.1} parent=5 // pred_fallthru
        _
      %p223 = scmp.le.s32.totalorder 1, %s15
      %p224 = scmp.lt.s32.totalorder %s15, 3
      %p225 = pnand %p223, %p224
      %p226 = pneg %p225
      // Predicated region
      $region37: #{two_layer_net.1} parent=5 // pred_check
        _
      $region38: #{two_layer_net.1} parent=5 // pred_check_branch
        %228 = sbr.rel (%p225) target = $region40
      $region39: #{two_layer_net.1} parent=5 // pred_region
        %s229 = ssub.s32 %s15, 1
        %s230 = sand.u32 %s28, 1
        %s231 = scalar_lea.sflag [#allocation3], %s230
        %s232 = sand.u32 %s28, 1
        %s233 = smul.addr %s232, 32
        %s234 = scalar_lea.vmem [#allocation2], %s233
        // Predicated region
        $region41: #{two_layer_net.1} parent=39 // pred_check
          %p235 = pneg %p41
        $region42: #{two_layer_net.1} parent=39 // pred_check_branch
          %237 = sbr.rel (%p235) target = $region44
        $region43: #{two_layer_net.1} parent=39 // pred_region
          %238 = dma.done %s231, 512
        $region44: #{two_layer_net.1} parent=39 // pred_fallthru
          _
        // Predicated region
        $region45: #{two_layer_net.1} parent=39 // pred_check
          %p239 = pneg %p62
        $region46: #{two_layer_net.1} parent=39 // pred_check_branch
          %241 = sbr.rel (%p239) target = $region48
        $region47: #{two_layer_net.1} parent=39 // pred_region
          %242 = dma.done [#allocation5], 1664
        $region48: #{two_layer_net.1} parent=39 // pred_fallthru
          _
        // Predicated region
        $region49: #{two_layer_net.1} parent=39 // pred_check
          %p243 = pneg %p104
        $region50: #{two_layer_net.1} parent=39 // pred_check_branch
          %245 = sbr.rel (%p243) target = $region52
        $region51: #{two_layer_net.1} parent=39 // pred_region
          %246 = dma.done [#allocation5], 2048
        $region52: #{two_layer_net.1} parent=39 // pred_fallthru
          _
        %s247 = sand.u32 %s28, 1
        %s248 = scalar_lea.sflag [#allocation3], %s247
        %s249 = sand.u32 %s28, 1
        %s250 = smul.addr %s249, 32
        %s251 = scalar_lea.vmem [#allocation2], %s250
        %p252 = pneg %p41
        %p253 = pneg %p38
        %p254 = pneg %p62
        %p255 = pneg %p59
        %p256 = pneg %p83
        %p257 = pneg %p80
        %p258 = pneg %p104
        %p259 = pneg %p101
        %p260 = pneg %p125
        %p261 = pneg %p122
        %p262 = pneg %p151
        %p263 = pneg %p148
        %s264 = smul.u32 4, %s20
        %p265 = scmp.lt.s32.totalorder %s264, 7
        %s266 = scalar_select %p265, %s264, 7
        %s267 = smul.addr %s266, 8
        %s268 = scalar_lea.vmem %s5, %s267
        %s269 = smul.u32 4, %s20
        %s270 = smul.u32 4, %s20
        %p271 = scmp.lt.s32.totalorder %s270, 7
        %s272 = scalar_select %p271, %s270, 7
        %s273 = smul.addr %s272, 8
        %s274 = scalar_lea.vmem %s5, %s273
        %s275 = smul.u32 4, %s20
        %v276 = vld [vmem:[%s234] sm:$0xff]
        %v277 = vld [vmem:[%s234 + $0x8] sm:$0xff]
        %v278 = vld [vmem:[%s234 + $0x10] sm:$0xff]
        %v279 = vld [vmem:[%s234 + $0x18] sm:$0xff]
        %v280 = vld [vmem:[#allocation4] sm:$0xff]
        %v281 = vld [vmem:[#allocation4 + $0x8] sm:$0xff]
        %v282 = vld [vmem:[#allocation4 + $0x10] sm:$0xff]
        %v283 = vld [vmem:[#allocation4 + $0x18] sm:$0xff]
        %v284 = vld [vmem:[#allocation4 + $0x20] sm:$0xff]
        %v285 = vld [vmem:[#allocation4 + $0x28] sm:$0xff]
        %v286 = vld [vmem:[#allocation4 + $0x30] sm:$0xff]
        %v287 = vld [vmem:[#allocation4 + $0x38] sm:$0xff]
        %v288 = vld [vmem:[#allocation4 + $0x40] sm:$0xff]
        %v289 = vld [vmem:[#allocation4 + $0x48] sm:$0xff]
        %v290 = vld [vmem:[#allocation4 + $0x50] sm:$0xff]
        %v291 = vld [vmem:[#allocation4 + $0x58] sm:$0xff]
        %v292 = vld [vmem:[#allocation4 + $0x60] sm:$0xf]
        %v293 = vld [vmem:[%s2] sm:$0x1]
        %v295 = vlaneseq
        %v296 = vshrl.u32 %v295, 7
        %v297 = vsub.s32 0, %v296
        %v298 = vrot.slane %v293, %v297
        %vm300 = vcmask 818176
        %v302 = vsel %vm300, %v276, 0
        %v305 = vsel %vm300, %v277, 0
        %v308 = vsel %vm300, %v278, 0
        %v311 = vsel %vm300, %v279, 0
        %vm313 = vcmask 1043456
        %v315 = vsel %vm313, %v292, 0
        %317 = vmatprep.subr.mxu0 0.0
        %318 = vmatpush1.msra.mxu0 %v280
        %319 = vmatprep.subr.mxu0 0.0
        %320 = vmatpush1.msra.mxu0 %v281
        %321 = vmatprep.subr.mxu0 0.0
        %322 = vmatpush1.msra.mxu0 %v282
        %323 = vmatprep.subr.mxu0 0.0
        %324 = vmatpush1.msra.mxu0 %v283
        %325 = vmatprep.subr.mxu0 0.0
        %326 = vmatpush1.msra.mxu0 %v284
        %327 = vmatprep.subr.mxu0 0.0
        %328 = vmatpush1.msra.mxu0 %v285
        %329 = vmatprep.subr.mxu0 0.0
        %330 = vmatpush1.msra.mxu0 %v286
        %331 = vmatprep.subr.mxu0 0.0
        %332 = vmatpush1.msra.mxu0 %v287
        %333 = vmatprep.subr.mxu0 0.0
        %334 = vmatpush1.msra.mxu0 %v288
        %335 = vmatprep.subr.mxu0 0.0
        %336 = vmatpush1.msra.mxu0 %v289
        %337 = vmatprep.subr.mxu0 0.0
        %338 = vmatpush1.msra.mxu0 %v290
        %339 = vmatprep.subr.mxu0 0.0
        %340 = vmatpush1.msra.mxu0 %v291
        %341 = vmatprep.subr.mxu0 0.0
        %342 = vmatpush1.msra.mxu0 %v315
        %343 = vmatprep.subr.mxu0 0.0
        %344 = vmatpush1.msra.mxu0 0.0
        %345 = vmatprep.subr.mxu0 0.0
        %346 = vmatpush1.msra.mxu0 0.0
        %347 = vmatprep.subr.mxu0 0.0
        %348 = vmatpush1.msra.mxu0 0.0
        %349 = vmatprep.subr.mxu0 0.0
        %350 = vmatpush1.msra.mxu0 0.0
        %351 = vmatprep.subr.mxu0 0.0
        %352 = vmatpush1.msra.mxu0 0.0
        %353 = vmatprep.subr.mxu0 0.0
        %354 = vmatpush1.msra.mxu0 0.0
        %355 = vmatprep.subr.mxu0 0.0
        %356 = vmatpush1.msra.mxu0 0.0
        %357 = vmatprep.subr.mxu0 0.0
        %358 = vmatpush1.msra.mxu0 0.0
        %359 = vmatprep.subr.mxu0 0.0
        %360 = vmatpush1.msra.mxu0 0.0
        %361 = vmatprep.subr.mxu0 0.0
        %362 = vmatpush1.msra.mxu0 0.0
        %363 = vmatprep.subr.mxu0 0.0
        %364 = vmatpush1.msra.mxu0 0.0
        %365 = vmatprep.subr.mxu0 0.0
        %366 = vmatpush1.msra.mxu0 0.0
        %367 = vmatprep.subr.mxu0 0.0
        %368 = vmatpush1.msra.mxu0 0.0
        %369 = vmatprep.subr.mxu0 0.0
        %370 = vmatpush1.msra.mxu0 0.0
        %371 = vmatprep.subr.mxu0 0.0
        %372 = vmatpush1.msra.mxu0 0.0
        %373 = vmatprep.subr.mxu0 0.0
        %374 = vmatpush1.msra.mxu0 0.0
        %375 = vmatprep.subr.mxu0 0.0
        %376 = vmatpush1.msra.mxu0 0.0
        %377 = vmatprep.subr.mxu0 0.0
        %378 = vmatpush1.msra.mxu0 0.0
        %379 = vmatprep.subr.mxu0 0.0
        %380 = vmatpush1.msra.mxu0 0.0
        %381 = vmatprep.mubr.f32.mxu0 0.0
        %382 = vmatmul.mubr.f32.gmra.mrb[0].mxu0 %v302
        %v383 = vpop.f32.mrb[0].mxu0
        %v384 = vadd.f32 %v298, %v383
        %v385 = vpop.f32.mrb[0].mxu0
        %386 = vmatprep.mubr.f32.mxu0 0.0
        %387 = vmatmul.mubr.f32.gmra.mrb[0].mxu0 %v305
        %v388 = vpop.f32.mrb[0].mxu0
        %v389 = vadd.f32 %v298, %v388
        %v390 = vpop.f32.mrb[0].mxu0
        %391 = vmatprep.mubr.f32.mxu0 0.0
        %392 = vmatmul.mubr.f32.gmra.mrb[0].mxu0 %v308
        %v393 = vpop.f32.mrb[0].mxu0
        %v394 = vadd.f32 %v298, %v393
        %v395 = vpop.f32.mrb[0].mxu0
        %396 = vmatprep.mubr.f32.mxu0 0.0
        %397 = vmatmul.mubr.f32.gmra.mrb[0].mxu0 %v311
        %v398 = vpop.f32.mrb[0].mxu0
        %v399 = vadd.f32 %v298, %v398
        %v400 = vpop.f32.mrb[0].mxu0
        %401 = vdwg.mxu0
        %v402 = vmax.f32 %v384, 0.0
        %v403 = vmax.f32 %v389, 0.0
        %v404 = vmax.f32 %v394, 0.0
        %v405 = vmax.f32 %v399, 0.0
        %v406 = vld [vmem:[#allocation6] sm:$0xff]
        %v407 = vld [vmem:[#allocation6 + $0x8] sm:$0xff]
        %v408 = vld [vmem:[#allocation6 + $0x10] sm:$0xff]
        %v409 = vld [vmem:[#allocation6 + $0x18] sm:$0xff]
        %v410 = vld [vmem:[#allocation6 + $0x20] sm:$0xff]
        %v411 = vld [vmem:[#allocation6 + $0x28] sm:$0xff]
        %v412 = vld [vmem:[#allocation6 + $0x30] sm:$0xff]
        %v413 = vld [vmem:[#allocation6 + $0x38] sm:$0xff]
        %v414 = vld [vmem:[#allocation6 + $0x40] sm:$0xff]
        %v415 = vld [vmem:[#allocation6 + $0x48] sm:$0xff]
        %v416 = vld [vmem:[#allocation6 + $0x50] sm:$0xff]
        %v417 = vld [vmem:[#allocation6 + $0x58] sm:$0xff]
        %v418 = vld [vmem:[#allocation6 + $0x60] sm:$0xff]
        %v419 = vld [vmem:[#allocation6 + $0x68] sm:$0xff]
        %v420 = vld [vmem:[#allocation6 + $0x70] sm:$0xff]
        %v421 = vld [vmem:[#allocation6 + $0x78] sm:$0xff]
        %v422 = vld [vmem:[%s4] sm:$0x1]
        %v424 = vlaneseq
        %v425 = vshrl.u32 %v424, 7
        %v426 = vsub.s32 0, %v425
        %v427 = vrot.slane %v422, %v426
        %429 = vmatprep.subr.mxu0 0.0
        %430 = vmatpush1.msra.mxu0 %v406
        %431 = vmatprep.subr.mxu0 0.0
        %432 = vmatpush1.msra.mxu0 %v407
        %433 = vmatprep.subr.mxu0 0.0
        %434 = vmatpush1.msra.mxu0 %v408
        %435 = vmatprep.subr.mxu0 0.0
        %436 = vmatpush1.msra.mxu0 %v409
        %437 = vmatprep.subr.mxu0 0.0
        %438 = vmatpush1.msra.mxu0 %v410
        %439 = vmatprep.subr.mxu0 0.0
        %440 = vmatpush1.msra.mxu0 %v411
        %441 = vmatprep.subr.mxu0 0.0
        %442 = vmatpush1.msra.mxu0 %v412
        %443 = vmatprep.subr.mxu0 0.0
        %444 = vmatpush1.msra.mxu0 %v413
        %445 = vmatprep.subr.mxu0 0.0
        %446 = vmatpush1.msra.mxu0 %v414
        %447 = vmatprep.subr.mxu0 0.0
        %448 = vmatpush1.msra.mxu0 %v415
        %449 = vmatprep.subr.mxu0 0.0
        %450 = vmatpush1.msra.mxu0 %v416
        %451 = vmatprep.subr.mxu0 0.0
        %452 = vmatpush1.msra.mxu0 %v417
        %453 = vmatprep.subr.mxu0 0.0
        %454 = vmatpush1.msra.mxu0 %v418
        %455 = vmatprep.subr.mxu0 0.0
        %456 = vmatpush1.msra.mxu0 %v419
        %457 = vmatprep.subr.mxu0 0.0
        %458 = vmatpush1.msra.mxu0 %v420
        %459 = vmatprep.subr.mxu0 0.0
        %460 = vmatpush1.msra.mxu0 %v421
        %461 = vmatprep.subr.mxu0 0.0
        %462 = vmatpush1.msra.mxu0 0.0
        %463 = vmatprep.subr.mxu0 0.0
        %464 = vmatpush1.msra.mxu0 0.0
        %465 = vmatprep.subr.mxu0 0.0
        %466 = vmatpush1.msra.mxu0 0.0
        %467 = vmatprep.subr.mxu0 0.0
        %468 = vmatpush1.msra.mxu0 0.0
        %469 = vmatprep.subr.mxu0 0.0
        %470 = vmatpush1.msra.mxu0 0.0
        %471 = vmatprep.subr.mxu0 0.0
        %472 = vmatpush1.msra.mxu0 0.0
        %473 = vmatprep.subr.mxu0 0.0
        %474 = vmatpush1.msra.mxu0 0.0
        %475 = vmatprep.subr.mxu0 0.0
        %476 = vmatpush1.msra.mxu0 0.0
        %477 = vmatprep.subr.mxu0 0.0
        %478 = vmatpush1.msra.mxu0 0.0
        %479 = vmatprep.subr.mxu0 0.0
        %480 = vmatpush1.msra.mxu0 0.0
        %481 = vmatprep.subr.mxu0 0.0
        %482 = vmatpush1.msra.mxu0 0.0
        %483 = vmatprep.subr.mxu0 0.0
        %484 = vmatpush1.msra.mxu0 0.0
        %485 = vmatprep.subr.mxu0 0.0
        %486 = vmatpush1.msra.mxu0 0.0
        %487 = vmatprep.subr.mxu0 0.0
        %488 = vmatpush1.msra.mxu0 0.0
        %489 = vmatprep.subr.mxu0 0.0
        %490 = vmatpush1.msra.mxu0 0.0
        %491 = vmatprep.subr.mxu0 0.0
        %492 = vmatpush1.msra.mxu0 0.0
        %493 = vmatprep.mubr.f32.mxu0 0.0
        %494 = vmatmul.mubr.f32.gmra.mrb[0].mxu0 %v402
        %v495 = vpop.f32.mrb[0].mxu0
        %v496 = vadd.f32 %v427, %v495
        %v497 = vpop.f32.mrb[0].mxu0
        %498 = vmatprep.mubr.f32.mxu0 0.0
        %499 = vmatmul.mubr.f32.gmra.mrb[0].mxu0 %v403
        %v500 = vpop.f32.mrb[0].mxu0
        %v501 = vadd.f32 %v427, %v500
        %v502 = vpop.f32.mrb[0].mxu0
        %503 = vmatprep.mubr.f32.mxu0 0.0
        %504 = vmatmul.mubr.f32.gmra.mrb[0].mxu0 %v404
        %v505 = vpop.f32.mrb[0].mxu0
        %v506 = vadd.f32 %v427, %v505
        %v507 = vpop.f32.mrb[0].mxu0
        %508 = vmatprep.mubr.f32.mxu0 0.0
        %509 = vmatmul.mubr.f32.gmra.mrb[0].mxu0 %v405
        %v510 = vpop.f32.mrb[0].mxu0
        %v511 = vadd.f32 %v427, %v510
        %v512 = vpop.f32.mrb[0].mxu0
        %513 = vdwg.mxu0
        %514 = vst [vmem:[%s274] sm:$0xff] %v496
        %515 = vst [vmem:[%s274 + $0x8] sm:$0xff] %v501
        %516 = vst [vmem:[%s274 + $0x10] sm:$0xff] %v506
        %517 = vst [vmem:[%s274 + $0x18] sm:$0xff] %v511
        %s518 = smul.u32 4, %s20
        %p519 = scmp.lt.s32.totalorder %s518, 7
        %s520 = scalar_select %p519, %s518, 7
        %s521 = smul.addr %s520, 8
        %s522 = scalar_lea.vmem %s5, %s521
        // Predicated region
        $region53: #{two_layer_net.1} parent=39 // pred_check
          %p523 = pneg %p148
        $region54: #{two_layer_net.1} parent=39 // pred_check_branch
          %525 = sbr.rel (%p523) target = $region56
        $region55: #{two_layer_net.1} parent=39 // pred_region
          %s526 = smul.u32 4, %s20
        $region56: #{two_layer_net.1} parent=39 // pred_fallthru
          _
      $region40: #{two_layer_net.1} parent=5 // pred_fallthru
        _
      %p527 = scmp.le.s32.totalorder 2, %s15
      // Predicated region
      $region57: #{two_layer_net.1} parent=5 // pred_check
        %p528 = pneg %p527
      $region58: #{two_layer_net.1} parent=5 // pred_check_branch
        %530 = sbr.rel (%p528) target = $region60
      $region59: #{two_layer_net.1} parent=5 // pred_region
        %s531 = ssub.s32 %s15, 2
        // Predicated region
        $region61: #{two_layer_net.1} parent=59 // pred_check
          %p532 = pneg %p154
        $region62: #{two_layer_net.1} parent=59 // pred_check_branch
          %534 = sbr.rel (%p532) target = $region64
        $region63: #{two_layer_net.1} parent=59 // pred_region
          %s535 = smul.u32 4, %s21
          %p536 = scmp.lt.s32.totalorder %s535, 7
          %s537 = scalar_select %p536, %s535, 7
          %s538 = smul.addr %s537, 8
          %s539 = scalar_lea.vmem %s5, %s538
        $region64: #{two_layer_net.1} parent=59 // pred_fallthru
          _
      $region60: #{two_layer_net.1} parent=5 // pred_fallthru
        _
    $region6: #{two_layer_net.1} parent=1 // loop_footer
      %s19 = sadd.s32 1, %s15
    $region7: #{two_layer_net.1} parent=1 // loop_footer_branch
      %14 = sbr.rel target = $region3
    $region8: #{two_layer_net.1} parent=1 // loop_exit
      _
    %540 = vsyncpa [#allocation3], 1
    %s541 = scalar_lea.sflag [#allocation3], 1
    %542 = vsyncpa %s541, 1
    %543 = vsyncpa [#allocation5], 1

</llo_original>
